<compile_context>
chip_gen: v6e
topology: v6e:2x2x1
jax: 0.10.0
libtpu: 0.0.40
codegen_flags: <defaults>
</compile_context>

<pallas_src>
import functools

import jax
import jax.numpy as jnp
from jax.experimental import pallas as pl
from jax.experimental.pallas import tpu as pltpu

LANE = 128


def _round_up(x, m):
    return ((x + m - 1) // m) * m


# ----------------------------- Pallas kernel ------------------------------- #
def _fused_gcn_kernel(a_ref, x_ref, w_ref, b_ref, o_ref, *, num_layers):
    """All GCNConv layers fused; h stays resident in VMEM/vregs between layers.

    a_ref: [Np, Np]   zero-padded normalized adjacency (A_hat[dst, src])
    x_ref: [Np, Fp]   zero-padded node features
    w_ref: [L, Fp, Fp] zero-padded stacked layer weights
    b_ref: [L, 1, Fp]  zero-padded stacked layer biases
    o_ref: [Np, Fp]   lane-dense output block
    """
    a = a_ref[...]
    h = x_ref[...]
    for i in range(num_layers):               # static unroll -> straight-line MXU ops
        xw = jnp.dot(h, w_ref[i], preferred_element_type=jnp.float32)   # X @ W
        h = jnp.dot(a, xw, preferred_element_type=jnp.float32)          # A_hat @ (XW)
        h = h + b_ref[i]                       # [1, Fp] bias broadcast over nodes
        if i != num_layers - 1:
            h = jnp.maximum(h, 0.0)            # ReLU on all but the last layer
    o_ref[...] = h.astype(o_ref.dtype)


# ------------------------------ JAX glue ------------------------------------ #
def build_normalized_adjacency(edge_index, num_nodes):
    """Dense A_hat = D^{-1/2}(A+I)D^{-1/2} exactly as PyG's gcn_norm (edge weights = 1)."""
    row, col = edge_index[0], edge_index[1]          # row = src, col = dst
    loop = jnp.arange(num_nodes, dtype=edge_index.dtype)
    row = jnp.concatenate([row, loop])
    col = jnp.concatenate([col, loop])
    ones = jnp.ones(row.shape[0], dtype=jnp.float32)
    deg = jnp.zeros((num_nodes,), jnp.float32).at[col].add(ones)   # in-degree at target
    deg_inv_sqrt = jnp.where(deg > 0, jax.lax.rsqrt(deg), 0.0)
    norm = deg_inv_sqrt[row] * deg_inv_sqrt[col]
    # message from src (row) aggregated at dst (col):  out[dst] += norm * x[src]
    a_hat = jnp.zeros((num_nodes, num_nodes), jnp.float32).at[col, row].add(norm)
    return a_hat


def init_params(key, num_node_features, num_layers, hidden_dim, num_classes):
    """Deterministic Glorot-uniform weights + zero biases per GCNConv layer."""
    params = []
    dims = []
    for i in range(num_layers):
        if i == 0:
            dims.append((num_node_features, hidden_dim))
        elif i == num_layers - 1:
            dims.append((hidden_dim, num_classes))
        else:
            dims.append((hidden_dim, hidden_dim))
    for (f_in, f_out) in dims:
        key, wk = jax.random.split(key)
        limit = (6.0 / (f_in + f_out)) ** 0.5
        w = jax.random.uniform(wk, (f_in, f_out), jnp.float32, -limit, limit)
        b = jnp.zeros((1, f_out), jnp.float32)
        params.append((w, b))
    return params


def toy_gnn_forward(x, edge_index, params):
    """Fused TOYGNN forward: one pallas_call for all GCNConv layers."""
    n, f_in = x.shape
    num_layers = len(params)
    f_out_real = params[-1][0].shape[1]

    # Lane-dense padded shapes.  Zero padding is exact: padded nodes have zero
    # rows/cols in A_hat (degree 0 -> deg^{-1/2} = 0) so they never touch valid
    # rows, and padded W/b columns stay zero through every layer.
    n_pad = _round_up(n, LANE)
    f_pad = LANE
    for (w, _) in params:
        f_pad = max(f_pad, _round_up(w.shape[0], LANE), _round_up(w.shape[1], LANE))

    a_hat = build_normalized_adjacency(edge_index, n)
    a_pad = jnp.zeros((n_pad, n_pad), jnp.float32).at[:n, :n].set(a_hat)
    x_pad = jnp.zeros((n_pad, f_pad), jnp.float32).at[:n, :f_in].set(x)

    w_stack = jnp.zeros((num_layers, f_pad, f_pad), jnp.float32)
    b_stack = jnp.zeros((num_layers, 1, f_pad), jnp.float32)
    for i, (w, b) in enumerate(params):
        w_stack = w_stack.at[i, : w.shape[0], : w.shape[1]].set(w)
        b_stack = b_stack.at[i, :, : b.shape[1]].set(b)

    kernel = functools.partial(_fused_gcn_kernel, num_layers=num_layers)
    vmem = lambda: pl.BlockSpec(memory_space=pltpu.MemorySpace.VMEM)
    out_pad = pl.pallas_call(
        kernel,
        out_shape=jax.ShapeDtypeStruct((n_pad, f_pad), jnp.float32),
        in_specs=[vmem(), vmem(), vmem(), vmem()],
        out_specs=vmem(),
    )(a_pad, x_pad, w_stack, b_stack)

    return out_pad[:n, :f_out_real]


def toy_gnn_reference(x, edge_index, params):
    """Pure-JAX reference for validation."""
    n = x.shape[0]
    a_hat = build_normalized_adjacency(edge_index, n)
    h = x
    for i, (w, b) in enumerate(params):
        h = a_hat @ (h @ w) + b
        if i != len(params) - 1:
            h = jnp.maximum(h, 0.0)
    return h


# -------------------------------- main -------------------------------------- #
if __name__ == "__main__":
    NUM_NODES = 32
    NUM_EDGES = 64
    NUM_NODE_FEATURES = 16
    NUM_LAYERS = 3
    HIDDEN_DIM = 32
    NUM_CLASSES = 4

    key = jax.random.PRNGKey(0)
    kx, ke, kp = jax.random.split(key, 3)

    x = jax.random.normal(kx, (NUM_NODES, NUM_NODE_FEATURES), jnp.float32)
    edge_index = jax.random.randint(ke, (2, NUM_EDGES), 0, NUM_NODES, jnp.int32)
    params = init_params(kp, NUM_NODE_FEATURES, NUM_LAYERS, HIDDEN_DIM, NUM_CLASSES)

    out = toy_gnn_forward(x, edge_index, params)
    out = jax.block_until_ready(out)

    ref = toy_gnn_reference(x, edge_index, params)
    assert out.shape == (NUM_NODES, NUM_CLASSES), out.shape
    assert jnp.allclose(out, ref, atol=1e-4, rtol=1e-4), "mismatch vs reference"

    print("KERNEL_OK")
</pallas_src>

<mosaic_0001>
module attributes {stable_mosaic.version = 11 : i64} {
  func.func @_fused_gcn_kernel(%arg0: memref<128x128xf32, #tpu.memory_space<vmem>>, %arg1: memref<128x128xf32, #tpu.memory_space<vmem>>, %arg2: memref<3x128x128xf32, #tpu.memory_space<vmem>>, %arg3: memref<3x1x128xf32, #tpu.memory_space<vmem>>, %arg4: memref<128x128xf32, #tpu.memory_space<vmem>>) attributes {dimension_semantics = [], scalar_prefetch = 0 : i64, scratch_operands = 0 : i64, tpu.core_type = #tpu.core_type<tc>} {
    %c0 = arith.constant 0 : index
    %c0_0 = arith.constant 0 : index
    %0 = vector.load %arg0[%c0, %c0_0] : memref<128x128xf32, #tpu.memory_space<vmem>>, vector<128x128xf32>
    %c0_1 = arith.constant 0 : index
    %c0_2 = arith.constant 0 : index
    %1 = vector.load %arg1[%c0_1, %c0_2] : memref<128x128xf32, #tpu.memory_space<vmem>>, vector<128x128xf32>
    %c0_3 = arith.constant 0 : index
    %c0_4 = arith.constant 0 : index
    %c0_5 = arith.constant 0 : index
    %2 = vector.load %arg2[%c0_3, %c0_4, %c0_5] : memref<3x128x128xf32, #tpu.memory_space<vmem>>, vector<1x128x128xf32>
    %3 = vector.shape_cast %2 : vector<1x128x128xf32> to vector<128x128xf32>
    %cst = arith.constant dense<0.000000e+00> : vector<128x128xf32>
    %4 = tpu.matmul %1, %3, %cst {dimension_numbers = #tpu.dot_dimension_numbers<[1], [0], [0], [1], [0, 0, 1, 1], [], []>} : vector<128x128xf32>, vector<128x128xf32>, vector<128x128xf32> -> vector<128x128xf32>
    %cst_6 = arith.constant dense<0.000000e+00> : vector<128x128xf32>
    %5 = tpu.matmul %0, %4, %cst_6 {dimension_numbers = #tpu.dot_dimension_numbers<[1], [0], [0], [1], [0, 0, 1, 1], [], []>} : vector<128x128xf32>, vector<128x128xf32>, vector<128x128xf32> -> vector<128x128xf32>
    %c0_7 = arith.constant 0 : index
    %c0_8 = arith.constant 0 : index
    %c0_9 = arith.constant 0 : index
    %6 = vector.load %arg3[%c0_7, %c0_8, %c0_9] : memref<3x1x128xf32, #tpu.memory_space<vmem>>, vector<1x1x128xf32>
    %7 = vector.shape_cast %6 : vector<1x1x128xf32> to vector<1x128xf32>
    %8 = vector.broadcast %7 : vector<1x128xf32> to vector<128x128xf32>
    %9 = arith.addf %5, %8 : vector<128x128xf32>
    %cst_10 = arith.constant 0.000000e+00 : f32
    %10 = vector.broadcast %cst_10 : f32 to vector<128x128xf32>
    %11 = arith.maximumf %9, %10 : vector<128x128xf32>
    %c1 = arith.constant 1 : index
    %c0_11 = arith.constant 0 : index
    %c0_12 = arith.constant 0 : index
    %12 = vector.load %arg2[%c1, %c0_11, %c0_12] : memref<3x128x128xf32, #tpu.memory_space<vmem>>, vector<1x128x128xf32>
    %13 = vector.shape_cast %12 : vector<1x128x128xf32> to vector<128x128xf32>
    %cst_13 = arith.constant dense<0.000000e+00> : vector<128x128xf32>
    %14 = tpu.matmul %11, %13, %cst_13 {dimension_numbers = #tpu.dot_dimension_numbers<[1], [0], [0], [1], [0, 0, 1, 1], [], []>} : vector<128x128xf32>, vector<128x128xf32>, vector<128x128xf32> -> vector<128x128xf32>
    %cst_14 = arith.constant dense<0.000000e+00> : vector<128x128xf32>
    %15 = tpu.matmul %0, %14, %cst_14 {dimension_numbers = #tpu.dot_dimension_numbers<[1], [0], [0], [1], [0, 0, 1, 1], [], []>} : vector<128x128xf32>, vector<128x128xf32>, vector<128x128xf32> -> vector<128x128xf32>
    %c1_15 = arith.constant 1 : index
    %c0_16 = arith.constant 0 : index
    %c0_17 = arith.constant 0 : index
    %16 = vector.load %arg3[%c1_15, %c0_16, %c0_17] : memref<3x1x128xf32, #tpu.memory_space<vmem>>, vector<1x1x128xf32>
    %17 = vector.shape_cast %16 : vector<1x1x128xf32> to vector<1x128xf32>
    %18 = vector.broadcast %17 : vector<1x128xf32> to vector<128x128xf32>
    %19 = arith.addf %15, %18 : vector<128x128xf32>
    %cst_18 = arith.constant 0.000000e+00 : f32
    %20 = vector.broadcast %cst_18 : f32 to vector<128x128xf32>
    %21 = arith.maximumf %19, %20 : vector<128x128xf32>
    %c2 = arith.constant 2 : index
    %c0_19 = arith.constant 0 : index
    %c0_20 = arith.constant 0 : index
    %22 = vector.load %arg2[%c2, %c0_19, %c0_20] : memref<3x128x128xf32, #tpu.memory_space<vmem>>, vector<1x128x128xf32>
    %23 = vector.shape_cast %22 : vector<1x128x128xf32> to vector<128x128xf32>
    %cst_21 = arith.constant dense<0.000000e+00> : vector<128x128xf32>
    %24 = tpu.matmul %21, %23, %cst_21 {dimension_numbers = #tpu.dot_dimension_numbers<[1], [0], [0], [1], [0, 0, 1, 1], [], []>} : vector<128x128xf32>, vector<128x128xf32>, vector<128x128xf32> -> vector<128x128xf32>
    %cst_22 = arith.constant dense<0.000000e+00> : vector<128x128xf32>
    %25 = tpu.matmul %0, %24, %cst_22 {dimension_numbers = #tpu.dot_dimension_numbers<[1], [0], [0], [1], [0, 0, 1, 1], [], []>} : vector<128x128xf32>, vector<128x128xf32>, vector<128x128xf32> -> vector<128x128xf32>
    %c2_23 = arith.constant 2 : index
    %c0_24 = arith.constant 0 : index
    %c0_25 = arith.constant 0 : index
    %26 = vector.load %arg3[%c2_23, %c0_24, %c0_25] : memref<3x1x128xf32, #tpu.memory_space<vmem>>, vector<1x1x128xf32>
    %27 = vector.shape_cast %26 : vector<1x1x128xf32> to vector<1x128xf32>
    %28 = vector.broadcast %27 : vector<1x128xf32> to vector<128x128xf32>
    %29 = arith.addf %25, %28 : vector<128x128xf32>
    %c0_26 = arith.constant 0 : index
    %c0_27 = arith.constant 0 : index
    %30 = vector.load %arg4[%c0_26, %c0_27] : memref<128x128xf32, #tpu.memory_space<vmem>>, vector<128x128xf32>
    tpu.vector_store %arg4[%c0_26, %c0_27], %29 {strides = array<i32>} : memref<128x128xf32, #tpu.memory_space<vmem>>, vector<128x128xf32>,
    return
  }
}

</mosaic_0001>

<llo_original>
// kernel: tpu_custom_call.1
$region0: #{tpu_custom_call.1}
  #allocation0 [shape = 'u32[]', space=smem, size = 0x4, offset = 0x4, fixed_abs, tag = 'smem constant byte address 0x4 - core index']
  #allocation1 [shape = 'u32[144,128]{1,0:T(1,128)}', space=vmem, size = 0x12000, scoped, tag = 'internal scratch']
  %s0 = inlined_call_operand.hbm [shape: f32[128,128], index: 0, kind: input, shape index: {}]
  %s1 = inlined_call_operand.hbm [shape: f32[128,128], index: 1, kind: input, shape index: {}]
  %s2 = inlined_call_operand.hbm [shape: f32[3,128,128], index: 2, kind: input, shape index: {}]
  %s3 = inlined_call_operand.vmem [shape: f32[3,1,128], index: 3, kind: input, shape index: {}]
  %s4 = inlined_call_operand.hbm [shape: f32[128,128], index: 4, kind: output, shape index: {}]
  %s5 = sld [smem:[#allocation0]]
  $region38: #{tpu_custom_call.1} parent=0
    _
  %s7 = ssub.s32 1, %s5
  %s8 = scalar_select 0, %s7, %s5
  $region1: #{tpu_custom_call.1} parent=0
    #allocation2 [shape = 'u8[65536]{0}', space=vmem, size = 0x10000, scoped, tag = 'input window, operand 0, single buffered']
    #allocation3 [shape = 's32[1]{0}', space=sflag, size = 0x4, scoped, tag = 'scoped memory for tpu_custom_call.1']
    #allocation4 [shape = 's32[1]{0}', space=sflag, size = 0x4, scoped, tag = 'scoped memory for tpu_custom_call.1']
    #allocation5 [shape = 'u8[65536]{0}', space=vmem, size = 0x10000, scoped, tag = 'input window, operand 1, single buffered']
    #allocation6 [shape = 's32[1]{0}', space=sflag, size = 0x4, scoped, tag = 'scoped memory for tpu_custom_call.1']
    #allocation7 [shape = 'u8[196608]{0}', space=vmem, size = 0x30000, scoped, tag = 'input window, operand 2, single buffered']
    #allocation8 [shape = 'u8[65536]{0}', space=vmem, size = 0x10000, scoped, tag = 'output window, operand 0, single buffered']
    %9 = vsyncpa [#allocation3], 0
    %10 = vsyncpa [#allocation6], 0
    %11 = vsyncpa [#allocation4], 0
    // Predicated region
    $region2: #{tpu_custom_call.1} parent=1 // pred_check
      _
    $region3: #{tpu_custom_call.1} parent=1 // pred_check_branch
      %13 = sbr.rel (0) target = $region5
    $region4: #{tpu_custom_call.1} parent=1 // pred_region
      %s15 = ssub.s32 2048, 2048
      %16 = vsyncadd [#allocation3], %s15
      %s17 = sshll.u32 [#allocation2], 4
      %s18 = int_to_ptr.vmem [resolvable:$true] %s17
      %23 = dma.hbm_to_vmem [thread:$0]  %s0, 2048, %s18, [#allocation3], 128, 128, 8
    $region5: #{tpu_custom_call.1} parent=1 // pred_fallthru
      _
    // Predicated region
    $region6: #{tpu_custom_call.1} parent=1 // pred_check
      _
    $region7: #{tpu_custom_call.1} parent=1 // pred_check_branch
      %25 = sbr.rel (0) target = $region9
    $region8: #{tpu_custom_call.1} parent=1 // pred_region
      %s27 = ssub.s32 2048, 2048
      %28 = vsyncadd [#allocation6], %s27
      %s29 = sshll.u32 [#allocation5], 4
      %s30 = int_to_ptr.vmem [resolvable:$true] %s29
      %35 = dma.hbm_to_vmem [thread:$0]  %s1, 2048, %s30, [#allocation6], 128, 128, 8
    $region9: #{tpu_custom_call.1} parent=1 // pred_fallthru
      _
    // Predicated region
    $region10: #{tpu_custom_call.1} parent=1 // pred_check
      _
    $region11: #{tpu_custom_call.1} parent=1 // pred_check_branch
      %37 = sbr.rel (0) target = $region13
    $region12: #{tpu_custom_call.1} parent=1 // pred_region
      %s39 = ssub.s32 6144, 6144
      %40 = vsyncadd [#allocation6], %s39
      %s41 = sshll.u32 [#allocation7], 4
      %s42 = int_to_ptr.vmem [resolvable:$true] %s41
      %47 = dma.hbm_to_vmem [thread:$0]  %s2, 6144, %s42, [#allocation6], 128, 128, 8
    $region13: #{tpu_custom_call.1} parent=1 // pred_fallthru
      _
    // Predicated region
    $region14: #{tpu_custom_call.1} parent=1 // pred_check
      _
    $region15: #{tpu_custom_call.1} parent=1 // pred_check_branch
      %49 = sbr.rel (0) target = $region17
    $region16: #{tpu_custom_call.1} parent=1 // pred_region
      _
    $region17: #{tpu_custom_call.1} parent=1 // pred_fallthru
      _
    // Predicated region
    $region18: #{tpu_custom_call.1} parent=1 // pred_check
      _
    $region19: #{tpu_custom_call.1} parent=1 // pred_check_branch
      %51 = sbr.rel (0) target = $region21
    $region20: #{tpu_custom_call.1} parent=1 // pred_region
      %52 = dma.done [#allocation3], 2048
    $region21: #{tpu_custom_call.1} parent=1 // pred_fallthru
      _
    // Predicated region
    $region22: #{tpu_custom_call.1} parent=1 // pred_check
      _
    $region23: #{tpu_custom_call.1} parent=1 // pred_check_branch
      %54 = sbr.rel (0) target = $region25
    $region24: #{tpu_custom_call.1} parent=1 // pred_region
      %55 = dma.done [#allocation6], 2048
    $region25: #{tpu_custom_call.1} parent=1 // pred_fallthru
      _
    // Predicated region
    $region26: #{tpu_custom_call.1} parent=1 // pred_check
      _
    $region27: #{tpu_custom_call.1} parent=1 // pred_check_branch
      %57 = sbr.rel (0) target = $region29
    $region28: #{tpu_custom_call.1} parent=1 // pred_region
      %58 = dma.done [#allocation6], 6144
    $region29: #{tpu_custom_call.1} parent=1 // pred_fallthru
      _
    %v59 = vld [vmem:[#allocation2] sm:$0xff]
    %v60 = vld [vmem:[#allocation2 + $0x8] sm:$0xff]
    %v61 = vld [vmem:[#allocation2 + $0x10] sm:$0xff]
    %v62 = vld [vmem:[#allocation2 + $0x18] sm:$0xff]
    %v63 = vld [vmem:[#allocation2 + $0x20] sm:$0xff]
    %v64 = vld [vmem:[#allocation2 + $0x28] sm:$0xff]
    %v65 = vld [vmem:[#allocation2 + $0x30] sm:$0xff]
    %v66 = vld [vmem:[#allocation2 + $0x38] sm:$0xff]
    %v67 = vld [vmem:[#allocation2 + $0x40] sm:$0xff]
    %v68 = vld [vmem:[#allocation2 + $0x48] sm:$0xff]
    %v69 = vld [vmem:[#allocation2 + $0x50] sm:$0xff]
    %v70 = vld [vmem:[#allocation2 + $0x58] sm:$0xff]
    %v71 = vld [vmem:[#allocation2 + $0x60] sm:$0xff]
    %v72 = vld [vmem:[#allocation2 + $0x68] sm:$0xff]
    %v73 = vld [vmem:[#allocation2 + $0x70] sm:$0xff]
    %v74 = vld [vmem:[#allocation2 + $0x78] sm:$0xff]
    %v75 = vld [vmem:[#allocation5] sm:$0xff]
    %v76 = vld [vmem:[#allocation5 + $0x8] sm:$0xff]
    %v77 = vld [vmem:[#allocation5 + $0x10] sm:$0xff]
    %v78 = vld [vmem:[#allocation5 + $0x18] sm:$0xff]
    %v79 = vld [vmem:[#allocation5 + $0x20] sm:$0xff]
    %v80 = vld [vmem:[#allocation5 + $0x28] sm:$0xff]
    %v81 = vld [vmem:[#allocation5 + $0x30] sm:$0xff]
    %v82 = vld [vmem:[#allocation5 + $0x38] sm:$0xff]
    %v83 = vld [vmem:[#allocation5 + $0x40] sm:$0xff]
    %v84 = vld [vmem:[#allocation5 + $0x48] sm:$0xff]
    %v85 = vld [vmem:[#allocation5 + $0x50] sm:$0xff]
    %v86 = vld [vmem:[#allocation5 + $0x58] sm:$0xff]
    %v87 = vld [vmem:[#allocation5 + $0x60] sm:$0xff]
    %v88 = vld [vmem:[#allocation5 + $0x68] sm:$0xff]
    %v89 = vld [vmem:[#allocation5 + $0x70] sm:$0xff]
    %v90 = vld [vmem:[#allocation5 + $0x78] sm:$0xff]
    %v91 = vld [vmem:[#allocation7] sm:$0xff]
    %v92 = vld [vmem:[#allocation7 + $0x8] sm:$0xff]
    %v93 = vld [vmem:[#allocation7 + $0x10] sm:$0xff]
    %v94 = vld [vmem:[#allocation7 + $0x18] sm:$0xff]
    %v95 = vld [vmem:[#allocation7 + $0x20] sm:$0xff]
    %v96 = vld [vmem:[#allocation7 + $0x28] sm:$0xff]
    %v97 = vld [vmem:[#allocation7 + $0x30] sm:$0xff]
    %v98 = vld [vmem:[#allocation7 + $0x38] sm:$0xff]
    %v99 = vld [vmem:[#allocation7 + $0x40] sm:$0xff]
    %v100 = vld [vmem:[#allocation7 + $0x48] sm:$0xff]
    %v101 = vld [vmem:[#allocation7 + $0x50] sm:$0xff]
    %v102 = vld [vmem:[#allocation7 + $0x58] sm:$0xff]
    %v103 = vld [vmem:[#allocation7 + $0x60] sm:$0xff]
    %v104 = vld [vmem:[#allocation7 + $0x68] sm:$0xff]
    %v105 = vld [vmem:[#allocation7 + $0x70] sm:$0xff]
    %v106 = vld [vmem:[#allocation7 + $0x78] sm:$0xff]
    %107 = vmatprep.subr.mxu0 0.0
    %108 = vmatpush1.msra.mxu0 %v106
    %109 = vmatprep.subr.mxu0 0.0
    %110 = vmatpush1.msra.mxu0 %v105
    %111 = vmatprep.subr.mxu0 0.0
    %112 = vmatpush1.msra.mxu0 %v104
    %113 = vmatprep.subr.mxu0 0.0
    %114 = vmatpush1.msra.mxu0 %v103
    %115 = vmatprep.subr.mxu0 0.0
    %116 = vmatpush1.msra.mxu0 %v102
    %117 = vmatprep.subr.mxu0 0.0
    %118 = vmatpush1.msra.mxu0 %v101
    %119 = vmatprep.subr.mxu0 0.0
    %120 = vmatpush1.msra.mxu0 %v100
    %121 = vmatprep.subr.mxu0 0.0
    %122 = vmatpush1.msra.mxu0 %v99
    %123 = vmatprep.subr.mxu0 0.0
    %124 = vmatpush1.msra.mxu0 %v98
    %125 = vmatprep.subr.mxu0 0.0
    %126 = vmatpush1.msra.mxu0 %v97
    %127 = vmatprep.subr.mxu0 0.0
    %128 = vmatpush1.msra.mxu0 %v96
    %129 = vmatprep.subr.mxu0 0.0
    %130 = vmatpush1.msra.mxu0 %v95
    %131 = vmatprep.subr.mxu0 0.0
    %132 = vmatpush1.msra.mxu0 %v94
    %133 = vmatprep.subr.mxu0 0.0
    %134 = vmatpush1.msra.mxu0 %v93
    %135 = vmatprep.subr.mxu0 0.0
    %136 = vmatpush1.msra.mxu0 %v92
    %137 = vmatprep.subr.mxu0 0.0
    %138 = vmatpush1.msra.mxu0 %v91
    %139 = vmatprep.subr.mxu0 0.0
    %140 = vmatpush2.msra.mxu0 0.0
    %141 = vmatprep.subr.mxu0 0.0
    %142 = vmatpush2.msra.mxu0 0.0
    %143 = vmatprep.subr.mxu0 0.0
    %144 = vmatpush2.msra.mxu0 0.0
    %145 = vmatprep.subr.mxu0 0.0
    %146 = vmatpush2.msra.mxu0 0.0
    %147 = vmatprep.subr.mxu0 0.0
    %148 = vmatpush2.msra.mxu0 0.0
    %149 = vmatprep.subr.mxu0 0.0
    %150 = vmatpush2.msra.mxu0 0.0
    %151 = vmatprep.subr.mxu0 0.0
    %152 = vmatpush2.msra.mxu0 0.0
    %153 = vmatprep.subr.mxu0 0.0
    %154 = vmatpush2.msra.mxu0 0.0
    %155 = vmatprep.subr.mxu0 0.0
    %156 = vmatpush2.msra.mxu0 0.0
    %157 = vmatprep.subr.mxu0 0.0
    %158 = vmatpush2.msra.mxu0 0.0
    %159 = vmatprep.subr.mxu0 0.0
    %160 = vmatpush2.msra.mxu0 0.0
    %161 = vmatprep.subr.mxu0 0.0
    %162 = vmatpush2.msra.mxu0 0.0
    %163 = vmatprep.subr.mxu0 0.0
    %164 = vmatpush2.msra.mxu0 0.0
    %165 = vmatprep.subr.mxu0 0.0
    %166 = vmatpush2.msra.mxu0 0.0
    %167 = vmatprep.subr.mxu0 0.0
    %168 = vmatpush2.msra.mxu0 0.0
    %169 = vmatprep.subr.mxu0 0.0
    %170 = vmatpush2.msra.mxu0 0.0
    %171 = vmatprep.mubr.f32.mxu0 0.0
    %172 = vmatmul.mubr.f32.gmra.mxu0 %v75
    %v173 = vpop.f32.mrf.mxu0
    %v174 = vadd.f32 0.0, %v173
    %v175 = vpop.f32.mrf.mxu0
    %176 = vmatprep.mubr.f32.mxu0 0.0
    %177 = vmatmul.mubr.f32.gmra.mxu0 %v76
    %v178 = vpop.f32.mrf.mxu0
    %v179 = vadd.f32 0.0, %v178
    %v180 = vpop.f32.mrf.mxu0
    %181 = vmatprep.mubr.f32.mxu0 0.0
    %182 = vmatmul.mubr.f32.gmra.mxu0 %v77
    %v183 = vpop.f32.mrf.mxu0
    %v184 = vadd.f32 0.0, %v183
    %v185 = vpop.f32.mrf.mxu0
    %186 = vmatprep.mubr.f32.mxu0 0.0
    %187 = vmatmul.mubr.f32.gmra.mxu0 %v78
    %v188 = vpop.f32.mrf.mxu0
    %v189 = vadd.f32 0.0, %v188
    %v190 = vpop.f32.mrf.mxu0
    %191 = vmatprep.mubr.f32.mxu0 0.0
    %192 = vmatmul.mubr.f32.gmra.mxu0 %v79
    %v193 = vpop.f32.mrf.mxu0
    %v194 = vadd.f32 0.0, %v193
    %v195 = vpop.f32.mrf.mxu0
    %196 = vmatprep.mubr.f32.mxu0 0.0
    %197 = vmatmul.mubr.f32.gmra.mxu0 %v80
    %v198 = vpop.f32.mrf.mxu0
    %v199 = vadd.f32 0.0, %v198
    %v200 = vpop.f32.mrf.mxu0
    %201 = vmatprep.mubr.f32.mxu0 0.0
    %202 = vmatmul.mubr.f32.gmra.mxu0 %v81
    %v203 = vpop.f32.mrf.mxu0
    %v204 = vadd.f32 0.0, %v203
    %v205 = vpop.f32.mrf.mxu0
    %206 = vmatprep.mubr.f32.mxu0 0.0
    %207 = vmatmul.mubr.f32.gmra.mxu0 %v82
    %v208 = vpop.f32.mrf.mxu0
    %v209 = vadd.f32 0.0, %v208
    %v210 = vpop.f32.mrf.mxu0
    %211 = vmatprep.mubr.f32.mxu0 0.0
    %212 = vmatmul.mubr.f32.gmra.mxu0 %v83
    %v213 = vpop.f32.mrf.mxu0
    %v214 = vadd.f32 0.0, %v213
    %v215 = vpop.f32.mrf.mxu0
    %216 = vmatprep.mubr.f32.mxu0 0.0
    %217 = vmatmul.mubr.f32.gmra.mxu0 %v84
    %v218 = vpop.f32.mrf.mxu0
    %v219 = vadd.f32 0.0, %v218
    %v220 = vpop.f32.mrf.mxu0
    %221 = vmatprep.mubr.f32.mxu0 0.0
    %222 = vmatmul.mubr.f32.gmra.mxu0 %v85
    %v223 = vpop.f32.mrf.mxu0
    %v224 = vadd.f32 0.0, %v223
    %v225 = vpop.f32.mrf.mxu0
    %226 = vmatprep.mubr.f32.mxu0 0.0
    %227 = vmatmul.mubr.f32.gmra.mxu0 %v86
    %v228 = vpop.f32.mrf.mxu0
    %v229 = vadd.f32 0.0, %v228
    %v230 = vpop.f32.mrf.mxu0
    %231 = vmatprep.mubr.f32.mxu0 0.0
    %232 = vmatmul.mubr.f32.gmra.mxu0 %v87
    %v233 = vpop.f32.mrf.mxu0
    %v234 = vadd.f32 0.0, %v233
    %v235 = vpop.f32.mrf.mxu0
    %236 = vmatprep.mubr.f32.mxu0 0.0
    %237 = vmatmul.mubr.f32.gmra.mxu0 %v88
    %v238 = vpop.f32.mrf.mxu0
    %v239 = vadd.f32 0.0, %v238
    %v240 = vpop.f32.mrf.mxu0
    %241 = vmatprep.mubr.f32.mxu0 0.0
    %242 = vmatmul.mubr.f32.gmra.mxu0 %v89
    %v243 = vpop.f32.mrf.mxu0
    %v244 = vadd.f32 0.0, %v243
    %v245 = vpop.f32.mrf.mxu0
    %246 = vmatprep.mubr.f32.mxu0 0.0
    %247 = vmatmul.mubr.f32.gmra.mxu0 %v90
    %v248 = vpop.f32.mrf.mxu0
    %v249 = vadd.f32 0.0, %v248
    %v250 = vpop.f32.mrf.mxu0
    %251 = vdwg.mxu0
    %v252 = vld [vmem:[%s3] sm:$0x1]
    %v254 = vlaneseq
    %v255 = vshrl.u32 %v254, 7
    %v256 = vsub.s32 0, %v255
    %v257 = vrot.slane %v252, %v256
    %259 = vmatprep.subr.mxu0 0.0
    %260 = vmatpush1.msra.mxu0 %v249
    %261 = vmatprep.subr.mxu0 0.0
    %262 = vmatpush1.msra.mxu0 %v244
    %263 = vmatprep.subr.mxu0 0.0
    %264 = vmatpush1.msra.mxu0 %v239
    %265 = vmatprep.subr.mxu0 0.0
    %266 = vmatpush1.msra.mxu0 %v234
    %267 = vmatprep.subr.mxu0 0.0
    %268 = vmatpush1.msra.mxu0 %v229
    %269 = vmatprep.subr.mxu0 0.0
    %270 = vmatpush1.msra.mxu0 %v224
    %271 = vmatprep.subr.mxu0 0.0
    %272 = vmatpush1.msra.mxu0 %v219
    %273 = vmatprep.subr.mxu0 0.0
    %274 = vmatpush1.msra.mxu0 %v214
    %275 = vmatprep.subr.mxu0 0.0
    %276 = vmatpush1.msra.mxu0 %v209
    %277 = vmatprep.subr.mxu0 0.0
    %278 = vmatpush1.msra.mxu0 %v204
    %279 = vmatprep.subr.mxu0 0.0
    %280 = vmatpush1.msra.mxu0 %v199
    %281 = vmatprep.subr.mxu0 0.0
    %282 = vmatpush1.msra.mxu0 %v194
    %283 = vmatprep.subr.mxu0 0.0
    %284 = vmatpush1.msra.mxu0 %v189
    %285 = vmatprep.subr.mxu0 0.0
    %286 = vmatpush1.msra.mxu0 %v184
    %287 = vmatprep.subr.mxu0 0.0
    %288 = vmatpush1.msra.mxu0 %v179
    %289 = vmatprep.subr.mxu0 0.0
    %290 = vmatpush1.msra.mxu0 %v174
    %291 = vmatprep.subr.mxu0 0.0
    %292 = vmatpush2.msra.mxu0 0.0
    %293 = vmatprep.subr.mxu0 0.0
    %294 = vmatpush2.msra.mxu0 0.0
    %295 = vmatprep.subr.mxu0 0.0
    %296 = vmatpush2.msra.mxu0 0.0
    %297 = vmatprep.subr.mxu0 0.0
    %298 = vmatpush2.msra.mxu0 0.0
    %299 = vmatprep.subr.mxu0 0.0
    %300 = vmatpush2.msra.mxu0 0.0
    %301 = vmatprep.subr.mxu0 0.0
    %302 = vmatpush2.msra.mxu0 0.0
    %303 = vmatprep.subr.mxu0 0.0
    %304 = vmatpush2.msra.mxu0 0.0
    %305 = vmatprep.subr.mxu0 0.0
    %306 = vmatpush2.msra.mxu0 0.0
    %307 = vmatprep.subr.mxu0 0.0
    %308 = vmatpush2.msra.mxu0 0.0
    %309 = vmatprep.subr.mxu0 0.0
    %310 = vmatpush2.msra.mxu0 0.0
    %311 = vmatprep.subr.mxu0 0.0
    %312 = vmatpush2.msra.mxu0 0.0
    %313 = vmatprep.subr.mxu0 0.0
    %314 = vmatpush2.msra.mxu0 0.0
    %315 = vmatprep.subr.mxu0 0.0
    %316 = vmatpush2.msra.mxu0 0.0
    %317 = vmatprep.subr.mxu0 0.0
    %318 = vmatpush2.msra.mxu0 0.0
    %319 = vmatprep.subr.mxu0 0.0
    %320 = vmatpush2.msra.mxu0 0.0
    %321 = vmatprep.subr.mxu0 0.0
    %322 = vmatpush2.msra.mxu0 0.0
    %323 = vmatprep.mubr.f32.mxu0 0.0
    %324 = vmatmul.mubr.f32.gmra.mxu0 %v59
    %v325 = vpop.f32.mrf.mxu0
    %v326 = vadd.f32 %v257, %v325
    %v327 = vpop.f32.mrf.mxu0
    %328 = vmatprep.mubr.f32.mxu0 0.0
    %329 = vmatmul.mubr.f32.gmra.mxu0 %v60
    %v330 = vpop.f32.mrf.mxu0
    %v331 = vadd.f32 %v257, %v330
    %v332 = vpop.f32.mrf.mxu0
    %333 = vmatprep.mubr.f32.mxu0 0.0
    %334 = vmatmul.mubr.f32.gmra.mxu0 %v61
    %v335 = vpop.f32.mrf.mxu0
    %v336 = vadd.f32 %v257, %v335
    %v337 = vpop.f32.mrf.mxu0
    %338 = vmatprep.mubr.f32.mxu0 0.0
    %339 = vmatmul.mubr.f32.gmra.mxu0 %v62
    %v340 = vpop.f32.mrf.mxu0
    %v341 = vadd.f32 %v257, %v340
    %v342 = vpop.f32.mrf.mxu0
    %343 = vmatprep.mubr.f32.mxu0 0.0
    %344 = vmatmul.mubr.f32.gmra.mxu0 %v63
    %v345 = vpop.f32.mrf.mxu0
    %v346 = vadd.f32 %v257, %v345
    %v347 = vpop.f32.mrf.mxu0
    %348 = vmatprep.mubr.f32.mxu0 0.0
    %349 = vmatmul.mubr.f32.gmra.mxu0 %v64
    %v350 = vpop.f32.mrf.mxu0
    %v351 = vadd.f32 %v257, %v350
    %v352 = vpop.f32.mrf.mxu0
    %353 = vmatprep.mubr.f32.mxu0 0.0
    %354 = vmatmul.mubr.f32.gmra.mxu0 %v65
    %v355 = vpop.f32.mrf.mxu0
    %v356 = vadd.f32 %v257, %v355
    %v357 = vpop.f32.mrf.mxu0
    %358 = vmatprep.mubr.f32.mxu0 0.0
    %359 = vmatmul.mubr.f32.gmra.mxu0 %v66
    %v360 = vpop.f32.mrf.mxu0
    %v361 = vadd.f32 %v257, %v360
    %v362 = vpop.f32.mrf.mxu0
    %363 = vmatprep.mubr.f32.mxu0 0.0
    %364 = vmatmul.mubr.f32.gmra.mxu0 %v67
    %v365 = vpop.f32.mrf.mxu0
    %v366 = vadd.f32 %v257, %v365
    %v367 = vpop.f32.mrf.mxu0
    %368 = vmatprep.mubr.f32.mxu0 0.0
    %369 = vmatmul.mubr.f32.gmra.mxu0 %v68
    %v370 = vpop.f32.mrf.mxu0
    %v371 = vadd.f32 %v257, %v370
    %v372 = vpop.f32.mrf.mxu0
    %373 = vmatprep.mubr.f32.mxu0 0.0
    %374 = vmatmul.mubr.f32.gmra.mxu0 %v69
    %v375 = vpop.f32.mrf.mxu0
    %v376 = vadd.f32 %v257, %v375
    %v377 = vpop.f32.mrf.mxu0
    %378 = vmatprep.mubr.f32.mxu0 0.0
    %379 = vmatmul.mubr.f32.gmra.mxu0 %v70
    %v380 = vpop.f32.mrf.mxu0
    %v381 = vadd.f32 %v257, %v380
    %v382 = vpop.f32.mrf.mxu0
    %383 = vmatprep.mubr.f32.mxu0 0.0
    %384 = vmatmul.mubr.f32.gmra.mxu0 %v71
    %v385 = vpop.f32.mrf.mxu0
    %v386 = vadd.f32 %v257, %v385
    %v387 = vpop.f32.mrf.mxu0
    %388 = vmatprep.mubr.f32.mxu0 0.0
    %389 = vmatmul.mubr.f32.gmra.mxu0 %v72
    %v390 = vpop.f32.mrf.mxu0
    %v391 = vadd.f32 %v257, %v390
    %v392 = vpop.f32.mrf.mxu0
    %393 = vmatprep.mubr.f32.mxu0 0.0
    %394 = vmatmul.mubr.f32.gmra.mxu0 %v73
    %v395 = vpop.f32.mrf.mxu0
    %v396 = vadd.f32 %v257, %v395
    %v397 = vpop.f32.mrf.mxu0
    %398 = vmatprep.mubr.f32.mxu0 0.0
    %399 = vmatmul.mubr.f32.gmra.mxu0 %v74
    %v400 = vpop.f32.mrf.mxu0
    %v401 = vadd.f32 %v257, %v400
    %v402 = vpop.f32.mrf.mxu0
    %403 = vdwg.mxu0
    %v404 = vmax.f32 %v326, 0.0
    %v405 = vmax.f32 %v331, 0.0
    %v406 = vmax.f32 %v336, 0.0
    %v407 = vmax.f32 %v341, 0.0
    %v408 = vmax.f32 %v346, 0.0
    %v409 = vmax.f32 %v351, 0.0
    %v410 = vmax.f32 %v356, 0.0
    %v411 = vmax.f32 %v361, 0.0
    %v412 = vmax.f32 %v366, 0.0
    %v413 = vmax.f32 %v371, 0.0
    %v414 = vmax.f32 %v376, 0.0
    %v415 = vmax.f32 %v381, 0.0
    %v416 = vmax.f32 %v386, 0.0
    %v417 = vmax.f32 %v391, 0.0
    %v418 = vmax.f32 %v396, 0.0
    %v419 = vmax.f32 %v401, 0.0
    %s420 = scalar_lea.vmem [#allocation7], 128
    %v421 = vld [vmem:[%s420] sm:$0xff]
    %v422 = vld [vmem:[%s420 + $0x8] sm:$0xff]
    %v423 = vld [vmem:[%s420 + $0x10] sm:$0xff]
    %v424 = vld [vmem:[%s420 + $0x18] sm:$0xff]
    %v425 = vld [vmem:[%s420 + $0x20] sm:$0xff]
    %v426 = vld [vmem:[%s420 + $0x28] sm:$0xff]
    %v427 = vld [vmem:[%s420 + $0x30] sm:$0xff]
    %v428 = vld [vmem:[%s420 + $0x38] sm:$0xff]
    %v429 = vld [vmem:[%s420 + $0x40] sm:$0xff]
    %v430 = vld [vmem:[%s420 + $0x48] sm:$0xff]
    %v431 = vld [vmem:[%s420 + $0x50] sm:$0xff]
    %v432 = vld [vmem:[%s420 + $0x58] sm:$0xff]
    %v433 = vld [vmem:[%s420 + $0x60] sm:$0xff]
    %v434 = vld [vmem:[%s420 + $0x68] sm:$0xff]
    %v435 = vld [vmem:[%s420 + $0x70] sm:$0xff]
    %v436 = vld [vmem:[%s420 + $0x78] sm:$0xff]
    %437 = vmatprep.subr.mxu0 0.0
    %438 = vmatpush1.msra.mxu0 %v436
    %439 = vmatprep.subr.mxu0 0.0
    %440 = vmatpush1.msra.mxu0 %v435
    %441 = vmatprep.subr.mxu0 0.0
    %442 = vmatpush1.msra.mxu0 %v434
    %443 = vmatprep.subr.mxu0 0.0
    %444 = vmatpush1.msra.mxu0 %v433
    %445 = vmatprep.subr.mxu0 0.0
    %446 = vmatpush1.msra.mxu0 %v432
    %447 = vmatprep.subr.mxu0 0.0
    %448 = vmatpush1.msra.mxu0 %v431
    %449 = vmatprep.subr.mxu0 0.0
    %450 = vmatpush1.msra.mxu0 %v430
    %451 = vmatprep.subr.mxu0 0.0
    %452 = vmatpush1.msra.mxu0 %v429
    %453 = vmatprep.subr.mxu0 0.0
    %454 = vmatpush1.msra.mxu0 %v428
    %455 = vmatprep.subr.mxu0 0.0
    %456 = vmatpush1.msra.mxu0 %v427
    %457 = vmatprep.subr.mxu0 0.0
    %458 = vmatpush1.msra.mxu0 %v426
    %459 = vmatprep.subr.mxu0 0.0
    %460 = vmatpush1.msra.mxu0 %v425
    %461 = vmatprep.subr.mxu0 0.0
    %462 = vmatpush1.msra.mxu0 %v424
    %463 = vmatprep.subr.mxu0 0.0
    %464 = vmatpush1.msra.mxu0 %v423
    %465 = vmatprep.subr.mxu0 0.0
    %466 = vmatpush1.msra.mxu0 %v422
    %467 = vmatprep.subr.mxu0 0.0
    %468 = vmatpush1.msra.mxu0 %v421
    %469 = vmatprep.subr.mxu0 0.0
    %470 = vmatpush2.msra.mxu0 0.0
    %471 = vmatprep.subr.mxu0 0.0
    %472 = vmatpush2.msra.mxu0 0.0
    %473 = vmatprep.subr.mxu0 0.0
    %474 = vmatpush2.msra.mxu0 0.0
    %475 = vmatprep.subr.mxu0 0.0
    %476 = vmatpush2.msra.mxu0 0.0
    %477 = vmatprep.subr.mxu0 0.0
    %478 = vmatpush2.msra.mxu0 0.0
    %479 = vmatprep.subr.mxu0 0.0
    %480 = vmatpush2.msra.mxu0 0.0
    %481 = vmatprep.subr.mxu0 0.0
    %482 = vmatpush2.msra.mxu0 0.0
    %483 = vmatprep.subr.mxu0 0.0
    %484 = vmatpush2.msra.mxu0 0.0
    %485 = vmatprep.subr.mxu0 0.0
    %486 = vmatpush2.msra.mxu0 0.0
    %487 = vmatprep.subr.mxu0 0.0
    %488 = vmatpush2.msra.mxu0 0.0
    %489 = vmatprep.subr.mxu0 0.0
    %490 = vmatpush2.msra.mxu0 0.0
    %491 = vmatprep.subr.mxu0 0.0
    %492 = vmatpush2.msra.mxu0 0.0
    %493 = vmatprep.subr.mxu0 0.0
    %494 = vmatpush2.msra.mxu0 0.0
    %495 = vmatprep.subr.mxu0 0.0
    %496 = vmatpush2.msra.mxu0 0.0
    %497 = vmatprep.subr.mxu0 0.0
    %498 = vmatpush2.msra.mxu0 0.0
    %499 = vmatprep.subr.mxu0 0.0
    %500 = vmatpush2.msra.mxu0 0.0
    %501 = vmatprep.mubr.f32.mxu0 0.0
    %502 = vmatmul.mubr.f32.gmra.mxu0 %v404
    %v503 = vpop.f32.mrf.mxu0
    %v504 = vadd.f32 0.0, %v503
    %v505 = vpop.f32.mrf.mxu0
    %506 = vmatprep.mubr.f32.mxu0 0.0
    %507 = vmatmul.mubr.f32.gmra.mxu0 %v405
    %v508 = vpop.f32.mrf.mxu0
    %v509 = vadd.f32 0.0, %v508
    %v510 = vpop.f32.mrf.mxu0
    %511 = vmatprep.mubr.f32.mxu0 0.0
    %512 = vmatmul.mubr.f32.gmra.mxu0 %v406
    %v513 = vpop.f32.mrf.mxu0
    %v514 = vadd.f32 0.0, %v513
    %v515 = vpop.f32.mrf.mxu0
    %516 = vmatprep.mubr.f32.mxu0 0.0
    %517 = vmatmul.mubr.f32.gmra.mxu0 %v407
    %v518 = vpop.f32.mrf.mxu0
    %v519 = vadd.f32 0.0, %v518
    %v520 = vpop.f32.mrf.mxu0
    %521 = vmatprep.mubr.f32.mxu0 0.0
    %522 = vmatmul.mubr.f32.gmra.mxu0 %v408
    %v523 = vpop.f32.mrf.mxu0
    %v524 = vadd.f32 0.0, %v523
    %v525 = vpop.f32.mrf.mxu0
    %526 = vmatprep.mubr.f32.mxu0 0.0
    %527 = vmatmul.mubr.f32.gmra.mxu0 %v409
    %v528 = vpop.f32.mrf.mxu0
    %v529 = vadd.f32 0.0, %v528
    %v530 = vpop.f32.mrf.mxu0
    %531 = vmatprep.mubr.f32.mxu0 0.0
    %532 = vmatmul.mubr.f32.gmra.mxu0 %v410
    %v533 = vpop.f32.mrf.mxu0
    %v534 = vadd.f32 0.0, %v533
    %v535 = vpop.f32.mrf.mxu0
    %536 = vmatprep.mubr.f32.mxu0 0.0
    %537 = vmatmul.mubr.f32.gmra.mxu0 %v411
    %v538 = vpop.f32.mrf.mxu0
    %v539 = vadd.f32 0.0, %v538
    %v540 = vpop.f32.mrf.mxu0
    %541 = vmatprep.mubr.f32.mxu0 0.0
    %542 = vmatmul.mubr.f32.gmra.mxu0 %v412
    %v543 = vpop.f32.mrf.mxu0
    %v544 = vadd.f32 0.0, %v543
    %v545 = vpop.f32.mrf.mxu0
    %546 = vmatprep.mubr.f32.mxu0 0.0
    %547 = vmatmul.mubr.f32.gmra.mxu0 %v413
    %v548 = vpop.f32.mrf.mxu0
    %v549 = vadd.f32 0.0, %v548
    %v550 = vpop.f32.mrf.mxu0
    %551 = vmatprep.mubr.f32.mxu0 0.0
    %552 = vmatmul.mubr.f32.gmra.mxu0 %v414
    %v553 = vpop.f32.mrf.mxu0
    %v554 = vadd.f32 0.0, %v553
    %v555 = vpop.f32.mrf.mxu0
    %556 = vmatprep.mubr.f32.mxu0 0.0
    %557 = vmatmul.mubr.f32.gmra.mxu0 %v415
    %v558 = vpop.f32.mrf.mxu0
    %v559 = vadd.f32 0.0, %v558
    %v560 = vpop.f32.mrf.mxu0
    %561 = vmatprep.mubr.f32.mxu0 0.0
    %562 = vmatmul.mubr.f32.gmra.mxu0 %v416
    %v563 = vpop.f32.mrf.mxu0
    %v564 = vadd.f32 0.0, %v563
    %v565 = vpop.f32.mrf.mxu0
    %566 = vmatprep.mubr.f32.mxu0 0.0
    %567 = vmatmul.mubr.f32.gmra.mxu0 %v417
    %v568 = vpop.f32.mrf.mxu0
    %v569 = vadd.f32 0.0, %v568
    %v570 = vpop.f32.mrf.mxu0
    %571 = vmatprep.mubr.f32.mxu0 0.0
    %572 = vmatmul.mubr.f32.gmra.mxu0 %v418
    %v573 = vpop.f32.mrf.mxu0
    %v574 = vadd.f32 0.0, %v573
    %v575 = vpop.f32.mrf.mxu0
    %576 = vmatprep.mubr.f32.mxu0 0.0
    %577 = vmatmul.mubr.f32.gmra.mxu0 %v419
    %v578 = vpop.f32.mrf.mxu0
    %v579 = vadd.f32 0.0, %v578
    %v580 = vpop.f32.mrf.mxu0
    %581 = vdwg.mxu0
    %s582 = scalar_lea.vmem %s3, 1
    %v583 = vld [vmem:[%s582] sm:$0x1]
    %v585 = vlaneseq
    %v586 = vshrl.u32 %v585, 7
    %v587 = vsub.s32 0, %v586
    %v588 = vrot.slane %v583, %v587
    %590 = vmatprep.subr.mxu0 0.0
    %591 = vmatpush1.msra.mxu0 %v579
    %592 = vmatprep.subr.mxu0 0.0
    %593 = vmatpush1.msra.mxu0 %v574
    %594 = vmatprep.subr.mxu0 0.0
    %595 = vmatpush1.msra.mxu0 %v569
    %596 = vmatprep.subr.mxu0 0.0
    %597 = vmatpush1.msra.mxu0 %v564
    %598 = vmatprep.subr.mxu0 0.0
    %599 = vmatpush1.msra.mxu0 %v559
    %600 = vmatprep.subr.mxu0 0.0
    %601 = vmatpush1.msra.mxu0 %v554
    %602 = vmatprep.subr.mxu0 0.0
    %603 = vmatpush1.msra.mxu0 %v549
    %604 = vmatprep.subr.mxu0 0.0
    %605 = vmatpush1.msra.mxu0 %v544
    %606 = vmatprep.subr.mxu0 0.0
    %607 = vmatpush1.msra.mxu0 %v539
    %608 = vmatprep.subr.mxu0 0.0
    %609 = vmatpush1.msra.mxu0 %v534
    %610 = vmatprep.subr.mxu0 0.0
    %611 = vmatpush1.msra.mxu0 %v529
    %612 = vmatprep.subr.mxu0 0.0
    %613 = vmatpush1.msra.mxu0 %v524
    %614 = vmatprep.subr.mxu0 0.0
    %615 = vmatpush1.msra.mxu0 %v519
    %616 = vmatprep.subr.mxu0 0.0
    %617 = vmatpush1.msra.mxu0 %v514
    %618 = vmatprep.subr.mxu0 0.0
    %619 = vmatpush1.msra.mxu0 %v509
    %620 = vmatprep.subr.mxu0 0.0
    %621 = vmatpush1.msra.mxu0 %v504
    %622 = vmatprep.subr.mxu0 0.0
    %623 = vmatpush2.msra.mxu0 0.0
    %624 = vmatprep.subr.mxu0 0.0
    %625 = vmatpush2.msra.mxu0 0.0
    %626 = vmatprep.subr.mxu0 0.0
    %627 = vmatpush2.msra.mxu0 0.0
    %628 = vmatprep.subr.mxu0 0.0
    %629 = vmatpush2.msra.mxu0 0.0
    %630 = vmatprep.subr.mxu0 0.0
    %631 = vmatpush2.msra.mxu0 0.0
    %632 = vmatprep.subr.mxu0 0.0
    %633 = vmatpush2.msra.mxu0 0.0
    %634 = vmatprep.subr.mxu0 0.0
    %635 = vmatpush2.msra.mxu0 0.0
    %636 = vmatprep.subr.mxu0 0.0
    %637 = vmatpush2.msra.mxu0 0.0
    %638 = vmatprep.subr.mxu0 0.0
    %639 = vmatpush2.msra.mxu0 0.0
    %640 = vmatprep.subr.mxu0 0.0
    %641 = vmatpush2.msra.mxu0 0.0
    %642 = vmatprep.subr.mxu0 0.0
    %643 = vmatpush2.msra.mxu0 0.0
    %644 = vmatprep.subr.mxu0 0.0
    %645 = vmatpush2.msra.mxu0 0.0
    %646 = vmatprep.subr.mxu0 0.0
    %647 = vmatpush2.msra.mxu0 0.0
    %648 = vmatprep.subr.mxu0 0.0
    %649 = vmatpush2.msra.mxu0 0.0
    %650 = vmatprep.subr.mxu0 0.0
    %651 = vmatpush2.msra.mxu0 0.0
    %652 = vmatprep.subr.mxu0 0.0
    %653 = vmatpush2.msra.mxu0 0.0
    %654 = vmatprep.mubr.f32.mxu0 0.0
    %655 = vmatmul.mubr.f32.gmra.mxu0 %v59
    %v656 = vpop.f32.mrf.mxu0
    %v657 = vadd.f32 %v588, %v656
    %v658 = vpop.f32.mrf.mxu0
    %659 = vmatprep.mubr.f32.mxu0 0.0
    %660 = vmatmul.mubr.f32.gmra.mxu0 %v60
    %v661 = vpop.f32.mrf.mxu0
    %v662 = vadd.f32 %v588, %v661
    %v663 = vpop.f32.mrf.mxu0
    %664 = vmatprep.mubr.f32.mxu0 0.0
    %665 = vmatmul.mubr.f32.gmra.mxu0 %v61
    %v666 = vpop.f32.mrf.mxu0
    %v667 = vadd.f32 %v588, %v666
    %v668 = vpop.f32.mrf.mxu0
    %669 = vmatprep.mubr.f32.mxu0 0.0
    %670 = vmatmul.mubr.f32.gmra.mxu0 %v62
    %v671 = vpop.f32.mrf.mxu0
    %v672 = vadd.f32 %v588, %v671
    %v673 = vpop.f32.mrf.mxu0
    %674 = vmatprep.mubr.f32.mxu0 0.0
    %675 = vmatmul.mubr.f32.gmra.mxu0 %v63
    %v676 = vpop.f32.mrf.mxu0
    %v677 = vadd.f32 %v588, %v676
    %v678 = vpop.f32.mrf.mxu0
    %679 = vmatprep.mubr.f32.mxu0 0.0
    %680 = vmatmul.mubr.f32.gmra.mxu0 %v64
    %v681 = vpop.f32.mrf.mxu0
    %v682 = vadd.f32 %v588, %v681
    %v683 = vpop.f32.mrf.mxu0
    %684 = vmatprep.mubr.f32.mxu0 0.0
    %685 = vmatmul.mubr.f32.gmra.mxu0 %v65
    %v686 = vpop.f32.mrf.mxu0
    %v687 = vadd.f32 %v588, %v686
    %v688 = vpop.f32.mrf.mxu0
    %689 = vmatprep.mubr.f32.mxu0 0.0
    %690 = vmatmul.mubr.f32.gmra.mxu0 %v66
    %v691 = vpop.f32.mrf.mxu0
    %v692 = vadd.f32 %v588, %v691
    %v693 = vpop.f32.mrf.mxu0
    %694 = vmatprep.mubr.f32.mxu0 0.0
    %695 = vmatmul.mubr.f32.gmra.mxu0 %v67
    %v696 = vpop.f32.mrf.mxu0
    %v697 = vadd.f32 %v588, %v696
    %v698 = vpop.f32.mrf.mxu0
    %699 = vmatprep.mubr.f32.mxu0 0.0
    %700 = vmatmul.mubr.f32.gmra.mxu0 %v68
    %v701 = vpop.f32.mrf.mxu0
    %v702 = vadd.f32 %v588, %v701
    %v703 = vpop.f32.mrf.mxu0
    %704 = vmatprep.mubr.f32.mxu0 0.0
    %705 = vmatmul.mubr.f32.gmra.mxu0 %v69
    %v706 = vpop.f32.mrf.mxu0
    %v707 = vadd.f32 %v588, %v706
    %v708 = vpop.f32.mrf.mxu0
    %709 = vmatprep.mubr.f32.mxu0 0.0
    %710 = vmatmul.mubr.f32.gmra.mxu0 %v70
    %v711 = vpop.f32.mrf.mxu0
    %v712 = vadd.f32 %v588, %v711
    %v713 = vpop.f32.mrf.mxu0
    %714 = vmatprep.mubr.f32.mxu0 0.0
    %715 = vmatmul.mubr.f32.gmra.mxu0 %v71
    %v716 = vpop.f32.mrf.mxu0
    %v717 = vadd.f32 %v588, %v716
    %v718 = vpop.f32.mrf.mxu0
    %719 = vmatprep.mubr.f32.mxu0 0.0
    %720 = vmatmul.mubr.f32.gmra.mxu0 %v72
    %v721 = vpop.f32.mrf.mxu0
    %v722 = vadd.f32 %v588, %v721
    %v723 = vpop.f32.mrf.mxu0
    %724 = vmatprep.mubr.f32.mxu0 0.0
    %725 = vmatmul.mubr.f32.gmra.mxu0 %v73
    %v726 = vpop.f32.mrf.mxu0
    %v727 = vadd.f32 %v588, %v726
    %v728 = vpop.f32.mrf.mxu0
    %729 = vmatprep.mubr.f32.mxu0 0.0
    %730 = vmatmul.mubr.f32.gmra.mxu0 %v74
    %v731 = vpop.f32.mrf.mxu0
    %v732 = vadd.f32 %v588, %v731
    %v733 = vpop.f32.mrf.mxu0
    %734 = vdwg.mxu0
    %v735 = vmax.f32 %v657, 0.0
    %v736 = vmax.f32 %v662, 0.0
    %v737 = vmax.f32 %v667, 0.0
    %v738 = vmax.f32 %v672, 0.0
    %v739 = vmax.f32 %v677, 0.0
    %v740 = vmax.f32 %v682, 0.0
    %v741 = vmax.f32 %v687, 0.0
    %v742 = vmax.f32 %v692, 0.0
    %v743 = vmax.f32 %v697, 0.0
    %v744 = vmax.f32 %v702, 0.0
    %v745 = vmax.f32 %v707, 0.0
    %v746 = vmax.f32 %v712, 0.0
    %v747 = vmax.f32 %v717, 0.0
    %v748 = vmax.f32 %v722, 0.0
    %v749 = vmax.f32 %v727, 0.0
    %v750 = vmax.f32 %v732, 0.0
    %s751 = scalar_lea.vmem [#allocation7], 256
    %v752 = vld [vmem:[%s751] sm:$0xff]
    %v753 = vld [vmem:[%s751 + $0x8] sm:$0xff]
    %v754 = vld [vmem:[%s751 + $0x10] sm:$0xff]
    %v755 = vld [vmem:[%s751 + $0x18] sm:$0xff]
    %v756 = vld [vmem:[%s751 + $0x20] sm:$0xff]
    %v757 = vld [vmem:[%s751 + $0x28] sm:$0xff]
    %v758 = vld [vmem:[%s751 + $0x30] sm:$0xff]
    %v759 = vld [vmem:[%s751 + $0x38] sm:$0xff]
    %v760 = vld [vmem:[%s751 + $0x40] sm:$0xff]
    %v761 = vld [vmem:[%s751 + $0x48] sm:$0xff]
    %v762 = vld [vmem:[%s751 + $0x50] sm:$0xff]
    %v763 = vld [vmem:[%s751 + $0x58] sm:$0xff]
    %v764 = vld [vmem:[%s751 + $0x60] sm:$0xff]
    %v765 = vld [vmem:[%s751 + $0x68] sm:$0xff]
    %v766 = vld [vmem:[%s751 + $0x70] sm:$0xff]
    %v767 = vld [vmem:[%s751 + $0x78] sm:$0xff]
    %768 = vmatprep.subr.mxu0 0.0
    %769 = vmatpush1.msra.mxu0 %v767
    %770 = vmatprep.subr.mxu0 0.0
    %771 = vmatpush1.msra.mxu0 %v766
    %772 = vmatprep.subr.mxu0 0.0
    %773 = vmatpush1.msra.mxu0 %v765
    %774 = vmatprep.subr.mxu0 0.0
    %775 = vmatpush1.msra.mxu0 %v764
    %776 = vmatprep.subr.mxu0 0.0
    %777 = vmatpush1.msra.mxu0 %v763
    %778 = vmatprep.subr.mxu0 0.0
    %779 = vmatpush1.msra.mxu0 %v762
    %780 = vmatprep.subr.mxu0 0.0
    %781 = vmatpush1.msra.mxu0 %v761
    %782 = vmatprep.subr.mxu0 0.0
    %783 = vmatpush1.msra.mxu0 %v760
    %784 = vmatprep.subr.mxu0 0.0
    %785 = vmatpush1.msra.mxu0 %v759
    %786 = vmatprep.subr.mxu0 0.0
    %787 = vmatpush1.msra.mxu0 %v758
    %788 = vmatprep.subr.mxu0 0.0
    %789 = vmatpush1.msra.mxu0 %v757
    %790 = vmatprep.subr.mxu0 0.0
    %791 = vmatpush1.msra.mxu0 %v756
    %792 = vmatprep.subr.mxu0 0.0
    %793 = vmatpush1.msra.mxu0 %v755
    %794 = vmatprep.subr.mxu0 0.0
    %795 = vmatpush1.msra.mxu0 %v754
    %796 = vmatprep.subr.mxu0 0.0
    %797 = vmatpush1.msra.mxu0 %v753
    %798 = vmatprep.subr.mxu0 0.0
    %799 = vmatpush1.msra.mxu0 %v752
    %800 = vmatprep.subr.mxu0 0.0
    %801 = vmatpush2.msra.mxu0 0.0
    %802 = vmatprep.subr.mxu0 0.0
    %803 = vmatpush2.msra.mxu0 0.0
    %804 = vmatprep.subr.mxu0 0.0
    %805 = vmatpush2.msra.mxu0 0.0
    %806 = vmatprep.subr.mxu0 0.0
    %807 = vmatpush2.msra.mxu0 0.0
    %808 = vmatprep.subr.mxu0 0.0
    %809 = vmatpush2.msra.mxu0 0.0
    %810 = vmatprep.subr.mxu0 0.0
    %811 = vmatpush2.msra.mxu0 0.0
    %812 = vmatprep.subr.mxu0 0.0
    %813 = vmatpush2.msra.mxu0 0.0
    %814 = vmatprep.subr.mxu0 0.0
    %815 = vmatpush2.msra.mxu0 0.0
    %816 = vmatprep.subr.mxu0 0.0
    %817 = vmatpush2.msra.mxu0 0.0
    %818 = vmatprep.subr.mxu0 0.0
    %819 = vmatpush2.msra.mxu0 0.0
    %820 = vmatprep.subr.mxu0 0.0
    %821 = vmatpush2.msra.mxu0 0.0
    %822 = vmatprep.subr.mxu0 0.0
    %823 = vmatpush2.msra.mxu0 0.0
    %824 = vmatprep.subr.mxu0 0.0
    %825 = vmatpush2.msra.mxu0 0.0
    %826 = vmatprep.subr.mxu0 0.0
    %827 = vmatpush2.msra.mxu0 0.0
    %828 = vmatprep.subr.mxu0 0.0
    %829 = vmatpush2.msra.mxu0 0.0
    %830 = vmatprep.subr.mxu0 0.0
    %831 = vmatpush2.msra.mxu0 0.0
    %832 = vmatprep.mubr.f32.mxu0 0.0
    %833 = vmatmul.mubr.f32.gmra.mxu0 %v735
    %v834 = vpop.f32.mrf.mxu0
    %v835 = vadd.f32 0.0, %v834
    %v836 = vpop.f32.mrf.mxu0
    %837 = vmatprep.mubr.f32.mxu0 0.0
    %838 = vmatmul.mubr.f32.gmra.mxu0 %v736
    %v839 = vpop.f32.mrf.mxu0
    %v840 = vadd.f32 0.0, %v839
    %v841 = vpop.f32.mrf.mxu0
    %842 = vmatprep.mubr.f32.mxu0 0.0
    %843 = vmatmul.mubr.f32.gmra.mxu0 %v737
    %v844 = vpop.f32.mrf.mxu0
    %v845 = vadd.f32 0.0, %v844
    %v846 = vpop.f32.mrf.mxu0
    %847 = vmatprep.mubr.f32.mxu0 0.0
    %848 = vmatmul.mubr.f32.gmra.mxu0 %v738
    %v849 = vpop.f32.mrf.mxu0
    %v850 = vadd.f32 0.0, %v849
    %v851 = vpop.f32.mrf.mxu0
    %852 = vmatprep.mubr.f32.mxu0 0.0
    %853 = vmatmul.mubr.f32.gmra.mxu0 %v739
    %v854 = vpop.f32.mrf.mxu0
    %v855 = vadd.f32 0.0, %v854
    %v856 = vpop.f32.mrf.mxu0
    %857 = vmatprep.mubr.f32.mxu0 0.0
    %858 = vmatmul.mubr.f32.gmra.mxu0 %v740
    %v859 = vpop.f32.mrf.mxu0
    %v860 = vadd.f32 0.0, %v859
    %v861 = vpop.f32.mrf.mxu0
    %862 = vmatprep.mubr.f32.mxu0 0.0
    %863 = vmatmul.mubr.f32.gmra.mxu0 %v741
    %v864 = vpop.f32.mrf.mxu0
    %v865 = vadd.f32 0.0, %v864
    %v866 = vpop.f32.mrf.mxu0
    %867 = vmatprep.mubr.f32.mxu0 0.0
    %868 = vmatmul.mubr.f32.gmra.mxu0 %v742
    %v869 = vpop.f32.mrf.mxu0
    %v870 = vadd.f32 0.0, %v869
    %v871 = vpop.f32.mrf.mxu0
    %872 = vmatprep.mubr.f32.mxu0 0.0
    %873 = vmatmul.mubr.f32.gmra.mxu0 %v743
    %v874 = vpop.f32.mrf.mxu0
    %v875 = vadd.f32 0.0, %v874
    %v876 = vpop.f32.mrf.mxu0
    %877 = vmatprep.mubr.f32.mxu0 0.0
    %878 = vmatmul.mubr.f32.gmra.mxu0 %v744
    %v879 = vpop.f32.mrf.mxu0
    %v880 = vadd.f32 0.0, %v879
    %v881 = vpop.f32.mrf.mxu0
    %882 = vmatprep.mubr.f32.mxu0 0.0
    %883 = vmatmul.mubr.f32.gmra.mxu0 %v745
    %v884 = vpop.f32.mrf.mxu0
    %v885 = vadd.f32 0.0, %v884
    %v886 = vpop.f32.mrf.mxu0
    %887 = vmatprep.mubr.f32.mxu0 0.0
    %888 = vmatmul.mubr.f32.gmra.mxu0 %v746
    %v889 = vpop.f32.mrf.mxu0
    %v890 = vadd.f32 0.0, %v889
    %v891 = vpop.f32.mrf.mxu0
    %892 = vmatprep.mubr.f32.mxu0 0.0
    %893 = vmatmul.mubr.f32.gmra.mxu0 %v747
    %v894 = vpop.f32.mrf.mxu0
    %v895 = vadd.f32 0.0, %v894
    %v896 = vpop.f32.mrf.mxu0
    %897 = vmatprep.mubr.f32.mxu0 0.0
    %898 = vmatmul.mubr.f32.gmra.mxu0 %v748
    %v899 = vpop.f32.mrf.mxu0
    %v900 = vadd.f32 0.0, %v899
    %v901 = vpop.f32.mrf.mxu0
    %902 = vmatprep.mubr.f32.mxu0 0.0
    %903 = vmatmul.mubr.f32.gmra.mxu0 %v749
    %v904 = vpop.f32.mrf.mxu0
    %v905 = vadd.f32 0.0, %v904
    %v906 = vpop.f32.mrf.mxu0
    %907 = vmatprep.mubr.f32.mxu0 0.0
    %908 = vmatmul.mubr.f32.gmra.mxu0 %v750
    %v909 = vpop.f32.mrf.mxu0
    %v910 = vadd.f32 0.0, %v909
    %v911 = vpop.f32.mrf.mxu0
    %912 = vdwg.mxu0
    %s913 = scalar_lea.vmem %s3, 2
    %v914 = vld [vmem:[%s913] sm:$0x1]
    %v916 = vlaneseq
    %v917 = vshrl.u32 %v916, 7
    %v918 = vsub.s32 0, %v917
    %v919 = vrot.slane %v914, %v918
    %921 = vmatprep.subr.mxu0 0.0
    %922 = vmatpush1.msra.mxu0 %v910
    %923 = vmatprep.subr.mxu0 0.0
    %924 = vmatpush1.msra.mxu0 %v905
    %925 = vmatprep.subr.mxu0 0.0
    %926 = vmatpush1.msra.mxu0 %v900
    %927 = vmatprep.subr.mxu0 0.0
    %928 = vmatpush1.msra.mxu0 %v895
    %929 = vmatprep.subr.mxu0 0.0
    %930 = vmatpush1.msra.mxu0 %v890
    %931 = vmatprep.subr.mxu0 0.0
    %932 = vmatpush1.msra.mxu0 %v885
    %933 = vmatprep.subr.mxu0 0.0
    %934 = vmatpush1.msra.mxu0 %v880
    %935 = vmatprep.subr.mxu0 0.0
    %936 = vmatpush1.msra.mxu0 %v875
    %937 = vmatprep.subr.mxu0 0.0
    %938 = vmatpush1.msra.mxu0 %v870
    %939 = vmatprep.subr.mxu0 0.0
    %940 = vmatpush1.msra.mxu0 %v865
    %941 = vmatprep.subr.mxu0 0.0
    %942 = vmatpush1.msra.mxu0 %v860
    %943 = vmatprep.subr.mxu0 0.0
    %944 = vmatpush1.msra.mxu0 %v855
    %945 = vmatprep.subr.mxu0 0.0
    %946 = vmatpush1.msra.mxu0 %v850
    %947 = vmatprep.subr.mxu0 0.0
    %948 = vmatpush1.msra.mxu0 %v845
    %949 = vmatprep.subr.mxu0 0.0
    %950 = vmatpush1.msra.mxu0 %v840
    %951 = vmatprep.subr.mxu0 0.0
    %952 = vmatpush1.msra.mxu0 %v835
    %953 = vmatprep.subr.mxu0 0.0
    %954 = vmatpush2.msra.mxu0 0.0
    %955 = vmatprep.subr.mxu0 0.0
    %956 = vmatpush2.msra.mxu0 0.0
    %957 = vmatprep.subr.mxu0 0.0
    %958 = vmatpush2.msra.mxu0 0.0
    %959 = vmatprep.subr.mxu0 0.0
    %960 = vmatpush2.msra.mxu0 0.0
    %961 = vmatprep.subr.mxu0 0.0
    %962 = vmatpush2.msra.mxu0 0.0
    %963 = vmatprep.subr.mxu0 0.0
    %964 = vmatpush2.msra.mxu0 0.0
    %965 = vmatprep.subr.mxu0 0.0
    %966 = vmatpush2.msra.mxu0 0.0
    %967 = vmatprep.subr.mxu0 0.0
    %968 = vmatpush2.msra.mxu0 0.0
    %969 = vmatprep.subr.mxu0 0.0
    %970 = vmatpush2.msra.mxu0 0.0
    %971 = vmatprep.subr.mxu0 0.0
    %972 = vmatpush2.msra.mxu0 0.0
    %973 = vmatprep.subr.mxu0 0.0
    %974 = vmatpush2.msra.mxu0 0.0
    %975 = vmatprep.subr.mxu0 0.0
    %976 = vmatpush2.msra.mxu0 0.0
    %977 = vmatprep.subr.mxu0 0.0
    %978 = vmatpush2.msra.mxu0 0.0
    %979 = vmatprep.subr.mxu0 0.0
    %980 = vmatpush2.msra.mxu0 0.0
    %981 = vmatprep.subr.mxu0 0.0
    %982 = vmatpush2.msra.mxu0 0.0
    %983 = vmatprep.subr.mxu0 0.0
    %984 = vmatpush2.msra.mxu0 0.0
    %985 = vmatprep.mubr.f32.mxu0 0.0
    %986 = vmatmul.mubr.f32.gmra.mxu0 %v59
    %v987 = vpop.f32.mrf.mxu0
    %v988 = vadd.f32 %v919, %v987
    %v989 = vpop.f32.mrf.mxu0
    %990 = vmatprep.mubr.f32.mxu0 0.0
    %991 = vmatmul.mubr.f32.gmra.mxu0 %v60
    %v992 = vpop.f32.mrf.mxu0
    %v993 = vadd.f32 %v919, %v992
    %v994 = vpop.f32.mrf.mxu0
    %995 = vmatprep.mubr.f32.mxu0 0.0
    %996 = vmatmul.mubr.f32.gmra.mxu0 %v61
    %v997 = vpop.f32.mrf.mxu0
    %v998 = vadd.f32 %v919, %v997
    %v999 = vpop.f32.mrf.mxu0
    %1000 = vmatprep.mubr.f32.mxu0 0.0
    %1001 = vmatmul.mubr.f32.gmra.mxu0 %v62
    %v1002 = vpop.f32.mrf.mxu0
    %v1003 = vadd.f32 %v919, %v1002
    %v1004 = vpop.f32.mrf.mxu0
    %1005 = vmatprep.mubr.f32.mxu0 0.0
    %1006 = vmatmul.mubr.f32.gmra.mxu0 %v63
    %v1007 = vpop.f32.mrf.mxu0
    %v1008 = vadd.f32 %v919, %v1007
    %v1009 = vpop.f32.mrf.mxu0
    %1010 = vmatprep.mubr.f32.mxu0 0.0
    %1011 = vmatmul.mubr.f32.gmra.mxu0 %v64
    %v1012 = vpop.f32.mrf.mxu0
    %v1013 = vadd.f32 %v919, %v1012
    %v1014 = vpop.f32.mrf.mxu0
    %1015 = vmatprep.mubr.f32.mxu0 0.0
    %1016 = vmatmul.mubr.f32.gmra.mxu0 %v65
    %v1017 = vpop.f32.mrf.mxu0
    %v1018 = vadd.f32 %v919, %v1017
    %v1019 = vpop.f32.mrf.mxu0
    %1020 = vmatprep.mubr.f32.mxu0 0.0
    %1021 = vmatmul.mubr.f32.gmra.mxu0 %v66
    %v1022 = vpop.f32.mrf.mxu0
    %v1023 = vadd.f32 %v919, %v1022
    %v1024 = vpop.f32.mrf.mxu0
    %1025 = vmatprep.mubr.f32.mxu0 0.0
    %1026 = vmatmul.mubr.f32.gmra.mxu0 %v67
    %v1027 = vpop.f32.mrf.mxu0
    %v1028 = vadd.f32 %v919, %v1027
    %v1029 = vpop.f32.mrf.mxu0
    %1030 = vmatprep.mubr.f32.mxu0 0.0
    %1031 = vmatmul.mubr.f32.gmra.mxu0 %v68
    %v1032 = vpop.f32.mrf.mxu0
    %v1033 = vadd.f32 %v919, %v1032
    %v1034 = vpop.f32.mrf.mxu0
    %1035 = vmatprep.mubr.f32.mxu0 0.0
    %1036 = vmatmul.mubr.f32.gmra.mxu0 %v69
    %v1037 = vpop.f32.mrf.mxu0
    %v1038 = vadd.f32 %v919, %v1037
    %v1039 = vpop.f32.mrf.mxu0
    %1040 = vmatprep.mubr.f32.mxu0 0.0
    %1041 = vmatmul.mubr.f32.gmra.mxu0 %v70
    %v1042 = vpop.f32.mrf.mxu0
    %v1043 = vadd.f32 %v919, %v1042
    %v1044 = vpop.f32.mrf.mxu0
    %1045 = vmatprep.mubr.f32.mxu0 0.0
    %1046 = vmatmul.mubr.f32.gmra.mxu0 %v71
    %v1047 = vpop.f32.mrf.mxu0
    %v1048 = vadd.f32 %v919, %v1047
    %v1049 = vpop.f32.mrf.mxu0
    %1050 = vmatprep.mubr.f32.mxu0 0.0
    %1051 = vmatmul.mubr.f32.gmra.mxu0 %v72
    %v1052 = vpop.f32.mrf.mxu0
    %v1053 = vadd.f32 %v919, %v1052
    %v1054 = vpop.f32.mrf.mxu0
    %1055 = vmatprep.mubr.f32.mxu0 0.0
    %1056 = vmatmul.mubr.f32.gmra.mxu0 %v73
    %v1057 = vpop.f32.mrf.mxu0
    %v1058 = vadd.f32 %v919, %v1057
    %v1059 = vpop.f32.mrf.mxu0
    %1060 = vmatprep.mubr.f32.mxu0 0.0
    %1061 = vmatmul.mubr.f32.gmra.mxu0 %v74
    %v1062 = vpop.f32.mrf.mxu0
    %v1063 = vadd.f32 %v919, %v1062
    %v1064 = vpop.f32.mrf.mxu0
    %1065 = vdwg.mxu0
    %1066 = vst [vmem:[#allocation8] sm:$0xff] %v988
    %1067 = vst [vmem:[#allocation8 + $0x8] sm:$0xff] %v993
    %1068 = vst [vmem:[#allocation8 + $0x10] sm:$0xff] %v998
    %1069 = vst [vmem:[#allocation8 + $0x18] sm:$0xff] %v1003
    %1070 = vst [vmem:[#allocation8 + $0x20] sm:$0xff] %v1008
    %1071 = vst [vmem:[#allocation8 + $0x28] sm:$0xff] %v1013
    %1072 = vst [vmem:[#allocation8 + $0x30] sm:$0xff] %v1018
    %1073 = vst [vmem:[#allocation8 + $0x38] sm:$0xff] %v1023
    %1074 = vst [vmem:[#allocation8 + $0x40] sm:$0xff] %v1028
    %1075 = vst [vmem:[#allocation8 + $0x48] sm:$0xff] %v1033
    %1076 = vst [vmem:[#allocation8 + $0x50] sm:$0xff] %v1038
    %1077 = vst [vmem:[#allocation8 + $0x58] sm:$0xff] %v1043
    %1078 = vst [vmem:[#allocation8 + $0x60] sm:$0xff] %v1048
    %1079 = vst [vmem:[#allocation8 + $0x68] sm:$0xff] %v1053
    %1080 = vst [vmem:[#allocation8 + $0x70] sm:$0xff] %v1058
    %1081 = vst [vmem:[#allocation8 + $0x78] sm:$0xff] %v1063
    // Predicated region
    $region30: #{tpu_custom_call.1} parent=1 // pred_check
      _
    $region31: #{tpu_custom_call.1} parent=1 // pred_check_branch
      %1083 = sbr.rel (0) target = $region33
    $region32: #{tpu_custom_call.1} parent=1 // pred_region
      %s1085 = ssub.s32 2048, 2048
      %1086 = vsyncadd [#allocation4], %s1085
      %s1087 = sshll.u32 [#allocation8], 4
      %s1088 = int_to_ptr.vmem [resolvable:$true] %s1087
      %1093 = dma.vmem_to_hbm [thread:$0]  %s1088, 2048, %s4, [#allocation4], 128, 128, 8
    $region33: #{tpu_custom_call.1} parent=1 // pred_fallthru
      _
    // Predicated region
    $region34: #{tpu_custom_call.1} parent=1 // pred_check
      _
    $region35: #{tpu_custom_call.1} parent=1 // pred_check_branch
      %1095 = sbr.rel (0) target = $region37
    $region36: #{tpu_custom_call.1} parent=1 // pred_region
      %1096 = dma.done [#allocation4], 2048
    $region37: #{tpu_custom_call.1} parent=1 // pred_fallthru
      _
    %1097 = vsyncpa [#allocation3], 1
    %1098 = vsyncpa [#allocation6], 1
    %1099 = vsyncpa [#allocation4], 1

</llo_original>
